<compile_context>
chip_gen: v5e
topology: v5e:2x2
jax: 0.10.0
libtpu: 0.0.40
codegen_flags: <defaults>
</compile_context>

<pallas_src>
import jax
import jax.numpy as jnp
import numpy as np
from jax.experimental import pallas as pl
from jax.experimental.pallas import tpu as pltpu

EPS = 1e-5
VMEM_LIMIT = 32 * 1024 * 1024


# ----------------------------- weight reshaping -----------------------------

def conv_w_taps(w):
    """(Cout, Cin, kh, kw) torch layout -> (kh*kw, Cin, Cout), tap-major."""
    Co, Ci, kh, kw = w.shape
    return jnp.transpose(w, (2, 3, 1, 0)).reshape(kh * kw, Ci, Co)


# ------------------------- BN1 batch-statistics kernel ----------------------

def _bn_stats_kernel(x_ref, sum_ref, sq_ref):
    """Per-image partial sum / sum-of-squares over all non-channel axes."""
    x = x_ref[...].astype(jnp.float32)
    s = x
    q = x * x
    while s.ndim > 2:                      # reduce leading (major) axes first
        s = jnp.sum(s, axis=0)
        q = jnp.sum(q, axis=0)
    sum_ref[...] = jnp.sum(s, axis=0, keepdims=True)
    sq_ref[...] = jnp.sum(q, axis=0, keepdims=True)


def bn_batch_stats(xin, count):
    """Training-mode BN statistics of a (N, ..., C) slab.

    Per-image partials -> the grid axis stays "parallel"; the tiny (N, C)
    combine runs in the wrapper.  Zero-padding rows/cols contribute nothing to
    either sum, so the padded activation can be fed directly (divide by the
    true element `count`).
    """
    N = xin.shape[0]
    C = xin.shape[-1]
    zeros = (0,) * (xin.ndim - 1)
    s, q = pl.pallas_call(
        _bn_stats_kernel,
        out_shape=(jax.ShapeDtypeStruct((N, 1, C), jnp.float32),
                   jax.ShapeDtypeStruct((N, 1, C), jnp.float32)),
        grid_spec=pltpu.PrefetchScalarGridSpec(
            num_scalar_prefetch=0,
            grid=(N,),
            in_specs=[pl.BlockSpec((None,) + tuple(xin.shape[1:]),
                                   lambda n: (n,) + zeros)],
            out_specs=[pl.BlockSpec((None, 1, C), lambda n: (n, 0, 0)),
                       pl.BlockSpec((None, 1, C), lambda n: (n, 0, 0))]),
        compiler_params=pltpu.CompilerParams(
            dimension_semantics=("parallel",),
            vmem_limit_bytes=VMEM_LIMIT),
    )(xin)
    tot = jnp.sum(s[:, 0, :], axis=0)
    totq = jnp.sum(q[:, 0, :], axis=0)
    mean = tot / count
    # Single-pass E[x^2]-E[x]^2 in f32: fine for activation-scale inputs.
    var = totq / count - mean * mean
    return mean, var


# ----------------------- fused BN->ReLU->conv3x3 kernel ----------------------

def fused_conv3x3(xin, w_taps, *, Hi, Wi, stride,
                  scale=None, shift=None,
                  sc=None, sc_scale=None, sc_shift=None, ws=None, sc_stride=1,
                  emit_stats=False, out_dtype=jnp.float32,
                  mm_dtype=jnp.float32):
    """Fused [BN affine+ReLU] -> 3x3 conv (pad=1) [+ shortcut] [-> BN stats].

    xin: spatially zero-padded activation, either
           (N, Hi+2, Wi+2, Ci)                      for stride == 1
           (N, 4, (Hi+2)//2, (Wi+2)//2, Ci)         space-to-depth, stride == 2
    w_taps: (9, Ci, Co) tap-major weights.
    scale/shift: (Ci,) BN affine fused on the conv input (None -> raw input).
    sc: padded ORIGINAL block input (same layouts as xin, keyed by sc_stride);
        ws given  -> 1x1 projection shortcut (optionally BN1-affine'd first),
        ws absent -> identity shortcut (raw input added to the output).
    emit_stats: also emit per-image (1, Co) sum / sum-of-squares of the f32
        conv output (used for BN2 of the next conv).
    """
    N = xin.shape[0]
    Ci = xin.shape[-1]
    Co = w_taps.shape[-1]
    Ho = (Hi - 1) // stride + 1
    Wo = (Wi - 1) // stride + 1
    MR = Ho * Wo
    pre_act = scale is not None
    shortcut = "none" if sc is None else ("project" if ws is not None else "identity")
    sc_pre_act = sc_scale is not None
    Cs = sc.shape[-1] if sc is not None else 0

    def tap_read(ref, ky, kx, ho, wo, st):
        """Read one 3x3 tap window; contiguous slices only (both strides)."""
        if st == 1:
            return ref[ky:ky + ho, kx:kx + wo, :]
        # space-to-depth layout: ref[2*rp+cp, i, j, :] == padded[2i+rp, 2j+cp, :]
        return ref[2 * (ky % 2) + (kx % 2),
                   ky // 2: ky // 2 + ho, kx // 2: kx // 2 + wo, :]

    def kernel(*refs):
        it = iter(refs)
        x_ref = next(it)
        if pre_act:
            scale_ref = next(it)
            shift_ref = next(it)
        w_ref = next(it)
        if shortcut != "none":
            sc_ref = next(it)
            if shortcut == "project":
                if sc_pre_act:
                    s1_ref = next(it)
                    h1_ref = next(it)
                ws_ref = next(it)
        out_ref = next(it)
        if emit_stats:
            sum_ref = next(it)
            sq_ref = next(it)

        acc = jnp.zeros((MR, Co), jnp.float32)
        if pre_act:
            scale_v = scale_ref[...].reshape(1, 1, Ci).astype(jnp.float32)
            shift_v = shift_ref[...].reshape(1, 1, Ci).astype(jnp.float32)
            rr = jax.lax.broadcasted_iota(jnp.int32, (Ho, Wo, 1), 0)
            cc = jax.lax.broadcasted_iota(jnp.int32, (Ho, Wo, 1), 1)

        # Nine 3x3 taps read straight from the padded block (no HBM im2col).
        for ky in range(3):
            for kx in range(3):
                tap = tap_read(x_ref, ky, kx, Ho, Wo, stride).astype(jnp.float32)
                if pre_act:
                    h = jnp.maximum(tap * scale_v + shift_v, 0.0)
                    # Conv zero-padding lives in the post-BN domain: re-zero
                    # any tap position that falls on the padded border.
                    pr = ky + stride * rr
                    pc = kx + stride * cc
                    inside = (pr >= 1) & (pr <= Hi) & (pc >= 1) & (pc <= Wi)
                    h = jnp.where(inside, h, 0.0)
                else:
                    h = tap                      # raw zero-padded input
                acc = acc + jnp.dot(h.reshape(MR, Ci).astype(mm_dtype),
                                    w_ref[3 * ky + kx],
                                    preferred_element_type=jnp.float32)

        if emit_stats:
            # BN2 statistics ride on the f32 accumulator (pre-shortcut).
            sum_ref[...] = jnp.sum(acc, axis=0, keepdims=True)
            sq_ref[...] = jnp.sum(acc * acc, axis=0, keepdims=True)

        if shortcut == "identity":
            res = tap_read(sc_ref, 1, 1, Ho, Wo, 1).astype(jnp.float32)
            acc = acc + res.reshape(MR, Co)
        elif shortcut == "project":
            src = tap_read(sc_ref, 1, 1, Ho, Wo, sc_stride).astype(jnp.float32)
            if sc_pre_act:
                s1 = s1_ref[...].reshape(1, 1, Cs).astype(jnp.float32)
                h1 = h1_ref[...].reshape(1, 1, Cs).astype(jnp.float32)
                src = jnp.maximum(src * s1 + h1, 0.0)
            acc = acc + jnp.dot(src.reshape(MR, Cs).astype(mm_dtype), ws_ref[...],
                                preferred_element_type=jnp.float32)

        out_ref[...] = acc.reshape(Ho, Wo, Co).astype(out_ref.dtype)

    # ------------------------------ specs --------------------------------
    def per_image_spec(arr):
        zeros = (0,) * (arr.ndim - 1)
        return pl.BlockSpec((None,) + tuple(arr.shape[1:]),
                            lambda n: (n,) + zeros)

    def broadcast_spec(arr):
        zeros = (0,) * arr.ndim
        return pl.BlockSpec(tuple(arr.shape), lambda n: zeros)

    in_specs = [per_image_spec(xin)]
    args = [xin]
    if pre_act:
        scale2d = scale.reshape(1, Ci).astype(jnp.float32)
        shift2d = shift.reshape(1, Ci).astype(jnp.float32)
        in_specs += [broadcast_spec(scale2d), broadcast_spec(shift2d)]
        args += [scale2d, shift2d]
    in_specs.append(broadcast_spec(w_taps))
    args.append(w_taps)
    if shortcut != "none":
        in_specs.append(per_image_spec(sc))
        args.append(sc)
        if shortcut == "project":
            if sc_pre_act:
                s1_2d = sc_scale.reshape(1, Cs).astype(jnp.float32)
                h1_2d = sc_shift.reshape(1, Cs).astype(jnp.float32)
                in_specs += [broadcast_spec(s1_2d), broadcast_spec(h1_2d)]
                args += [s1_2d, h1_2d]
            in_specs.append(broadcast_spec(ws))
            args.append(ws)

    out_shapes = [jax.ShapeDtypeStruct((N, Ho, Wo, Co), out_dtype)]
    out_specs = [pl.BlockSpec((None, Ho, Wo, Co), lambda n: (n, 0, 0, 0))]
    if emit_stats:
        for _ in range(2):
            out_shapes.append(jax.ShapeDtypeStruct((N, 1, Co), jnp.float32))
            out_specs.append(pl.BlockSpec((None, 1, Co), lambda n: (n, 0, 0)))

    outs = pl.pallas_call(
        kernel,
        out_shape=tuple(out_shapes),
        grid_spec=pltpu.PrefetchScalarGridSpec(
            num_scalar_prefetch=0,
            grid=(N,),
            in_specs=in_specs,
            out_specs=out_specs),
        compiler_params=pltpu.CompilerParams(
            dimension_semantics=("parallel",),
            vmem_limit_bytes=VMEM_LIMIT),
    )(*args)

    if emit_stats:
        return outs[0], outs[1], outs[2]
    return outs[0]


# ---------------------------------- glue -----------------------------------

def _space_to_depth(xp):
    """(N, Hp, Wp, C) -> (N, 4, Hp//2, Wp//2, C) parity decomposition."""
    N, Hp, Wp, C = xp.shape
    y = xp.reshape(N, Hp // 2, 2, Wp // 2, 2, C)
    return jnp.transpose(y, (0, 2, 4, 1, 3, 5)).reshape(N, 4, Hp // 2, Wp // 2, C)


def preact_block(x_nchw, params, *, stride=1, first=False,
                 matmul_dtype=jnp.float32):
    N, Cin, H, W = x_nchw.shape
    Cout = params["w1"].shape[0]
    has_proj = (stride != 1) or (Cin != Cout)
    Ho = (H - 1) // stride + 1
    Wo = (W - 1) // stride + 1

    x = jnp.transpose(x_nchw, (0, 2, 3, 1)).astype(jnp.float32)       # NHWC
    xp1 = jnp.pad(x, ((0, 0), (1, 1), (1, 1), (0, 0)))                # conv halo

    if stride == 2:
        # Space-to-depth so strided tap / shortcut reads stay contiguous.
        assert H % 2 == 0 and W % 2 == 0, "stride-2 path assumes even H, W"
        xin1 = _space_to_depth(xp1)
    else:
        xin1 = xp1

    # --- BN1 statistics (skipped for the first block) ---
    if not first:
        mean1, var1 = bn_batch_stats(xin1, N * H * W)
        scale1 = params["g1"] * jax.lax.rsqrt(var1 + EPS)
        shift1 = params["b1"] - mean1 * scale1
    else:
        scale1 = shift1 = None

    # --- conv1: fused BN1+ReLU -> 3x3/stride conv, emits BN2 stats ---
    w1 = conv_w_taps(params["w1"]).astype(matmul_dtype)               # (9,Cin,Cout)
    pre2, s2, q2 = fused_conv3x3(
        xin1, w1, Hi=H, Wi=W, stride=stride,
        scale=scale1, shift=shift1,
        emit_stats=True, out_dtype=matmul_dtype, mm_dtype=matmul_dtype)

    cnt2 = N * Ho * Wo
    mean2 = jnp.sum(s2[:, 0, :], axis=0) / cnt2
    var2 = jnp.sum(q2[:, 0, :], axis=0) / cnt2 - mean2 * mean2
    scale2 = params["g2"] * jax.lax.rsqrt(var2 + EPS)
    shift2 = params["b2"] - mean2 * scale2

    # --- conv2: fused BN2+ReLU -> 3x3 conv + (identity | 1x1-projection) ---
    xp2 = jnp.pad(pre2, ((0, 0), (1, 1), (1, 1), (0, 0)))
    w2 = conv_w_taps(params["w2"]).astype(matmul_dtype)
    ws = params["ws"][:, :, 0, 0].T.astype(matmul_dtype) if has_proj else None

    out = fused_conv3x3(
        xp2, w2, Hi=Ho, Wi=Wo, stride=1,
        scale=scale2, shift=shift2,
        sc=xin1,
        sc_scale=(scale1 if has_proj else None),
        sc_shift=(shift1 if has_proj else None),
        ws=ws, sc_stride=stride,
        emit_stats=False, out_dtype=jnp.float32, mm_dtype=matmul_dtype)

    return jnp.transpose(out, (0, 3, 1, 2))                          # NCHW


# ------------------------------ pure-JAX reference --------------------------

def reference(x, params, stride, first):
    def bn(z, g, b):
        mean = jnp.mean(z, axis=(0, 2, 3), keepdims=True)
        var = jnp.var(z, axis=(0, 2, 3), keepdims=True)
        return ((z - mean) * jax.lax.rsqrt(var + EPS)
                * g.reshape(1, -1, 1, 1) + b.reshape(1, -1, 1, 1))

    def conv(z, w, s, pad):
        return jax.lax.conv_general_dilated(
            z, w, (s, s), ((pad, pad), (pad, pad)),
            dimension_numbers=("NCHW", "OIHW", "NCHW"))

    Cin = x.shape[1]
    Cout = params["w1"].shape[0]
    out = jax.nn.relu(bn(x, params["g1"], params["b1"])) if not first else x
    if stride != 1 or Cin != Cout:
        shortcut = conv(out, params["ws"], stride, 0)
    else:
        shortcut = x
    h = conv(out, params["w1"], stride, 1)
    h = conv(jax.nn.relu(bn(h, params["g2"], params["b2"])), params["w2"], 1, 1)
    return h + shortcut


# ---------------------------------- main ------------------------------------

if __name__ == "__main__":
    def make_params(key, cin, cout, need_proj):
        ks = jax.random.split(key, 7)
        p = {
            "g1": 1.0 + 0.1 * jax.random.normal(ks[0], (cin,), jnp.float32),
            "b1": 0.1 * jax.random.normal(ks[1], (cin,), jnp.float32),
            "w1": 0.2 * jax.random.normal(ks[2], (cout, cin, 3, 3), jnp.float32),
            "g2": 1.0 + 0.1 * jax.random.normal(ks[3], (cout,), jnp.float32),
            "b2": 0.1 * jax.random.normal(ks[4], (cout,), jnp.float32),
            "w2": 0.2 * jax.random.normal(ks[5], (cout, cout, 3, 3), jnp.float32),
        }
        if need_proj:
            p["ws"] = 0.3 * jax.random.normal(ks[6], (cout, cin, 1, 1), jnp.float32)
        return p

    N, H, W = 2, 16, 16
    key = jax.random.PRNGKey(0)

    # (Cin, Cout, stride, first): projection / identity / strided / first-block
    configs = [(4, 8, 1, False), (8, 8, 1, False), (4, 8, 2, False), (4, 8, 1, True)]
    for cin, cout, stride, first in configs:
        kx_, kp_, key = jax.random.split(key, 3)
        x = jax.random.normal(kx_, (N, cin, H, W), dtype=jnp.float32)
        params = make_params(kp_, cin, cout, stride != 1 or cin != cout)
        out = jax.block_until_ready(
            preact_block(x, params, stride=stride, first=first))
        ref = reference(x, params, stride, first)
        np.testing.assert_allclose(np.asarray(out), np.asarray(ref),
                                   atol=1e-2, rtol=1e-2)

    # bf16 matmul-operand / bf16 intermediate path (v5e / v7x HBM-traffic
    # optimization; stats still accumulate in f32 in-kernel), looser tolerance.
    kx_, kp_, key = jax.random.split(key, 3)
    x = jax.random.normal(kx_, (N, 4, H, W), dtype=jnp.float32)
    params = make_params(kp_, 4, 8, True)
    out = jax.block_until_ready(
        preact_block(x, params, stride=1, first=False,
                     matmul_dtype=jnp.bfloat16))
    ref = reference(x, params, 1, False)
    np.testing.assert_allclose(np.asarray(out), np.asarray(ref),
                               atol=6e-2, rtol=6e-2)

    print("KERNEL_OK")
</pallas_src>

<mosaic_0001>
module attributes {stable_mosaic.version = 11 : i64} {
  func.func @_bn_stats_kernel(%arg0: i32, %arg1: memref<1x18x18x4xf32, #tpu.memory_space<vmem>>, %arg2: memref<1x1x4xf32, #tpu.memory_space<vmem>>, %arg3: memref<1x1x4xf32, #tpu.memory_space<vmem>>) attributes {dimension_semantics = [#tpu.dimension_semantics<parallel>], iteration_bounds = array<i64: 2>, scalar_prefetch = 0 : i64, scratch_operands = 0 : i64, tpu.core_type = #tpu.core_type<tc>, window_params = [{transform_indices = @transform_0, window_bounds = array<i64: 1, 18, 18, 4>}, {transform_indices = @transform_1, window_bounds = array<i64: 1, 1, 4>}, {transform_indices = @transform_2, window_bounds = array<i64: 1, 1, 4>}]} {
    %c0 = arith.constant 0 : index
    %c0_0 = arith.constant 0 : index
    %c0_1 = arith.constant 0 : index
    %c0_2 = arith.constant 0 : index
    %0 = vector.load %arg1[%c0, %c0_0, %c0_1, %c0_2] : memref<1x18x18x4xf32, #tpu.memory_space<vmem>>, vector<1x18x18x4xf32>
    %1 = vector.shape_cast %0 : vector<1x18x18x4xf32> to vector<18x18x4xf32>
    %2 = arith.mulf %1, %1 : vector<18x18x4xf32>
    %cst = arith.constant dense<0.000000e+00> : vector<18x4xf32>
    %3 = vector.multi_reduction <add>, %1, %cst [0] : vector<18x18x4xf32> to vector<18x4xf32>
    %cst_3 = arith.constant dense<0.000000e+00> : vector<18x4xf32>
    %4 = vector.multi_reduction <add>, %2, %cst_3 [0] : vector<18x18x4xf32> to vector<18x4xf32>
    %cst_4 = arith.constant dense<0.000000e+00> : vector<4xf32>
    %5 = vector.multi_reduction <add>, %3, %cst_4 [0] : vector<18x4xf32> to vector<4xf32>
    %6 = vector.shape_cast %5 : vector<4xf32> to vector<1x4xf32>
    %c0_5 = arith.constant 0 : index
    %c0_6 = arith.constant 0 : index
    %c0_7 = arith.constant 0 : index
    %7 = vector.load %arg2[%c0_5, %c0_6, %c0_7] : memref<1x1x4xf32, #tpu.memory_space<vmem>>, vector<1x1x4xf32>
    %8 = vector.shape_cast %7 : vector<1x1x4xf32> to vector<1x4xf32>
    %9 = vector.shape_cast %6 : vector<1x4xf32> to vector<1x1x4xf32>
    tpu.vector_store %arg2[%c0_5, %c0_6, %c0_7], %9 {strides = array<i32>} : memref<1x1x4xf32, #tpu.memory_space<vmem>>, vector<1x1x4xf32>,
    %cst_8 = arith.constant dense<0.000000e+00> : vector<4xf32>
    %10 = vector.multi_reduction <add>, %4, %cst_8 [0] : vector<18x4xf32> to vector<4xf32>
    %11 = vector.shape_cast %10 : vector<4xf32> to vector<1x4xf32>
    %c0_9 = arith.constant 0 : index
    %c0_10 = arith.constant 0 : index
    %c0_11 = arith.constant 0 : index
    %12 = vector.load %arg3[%c0_9, %c0_10, %c0_11] : memref<1x1x4xf32, #tpu.memory_space<vmem>>, vector<1x1x4xf32>
    %13 = vector.shape_cast %12 : vector<1x1x4xf32> to vector<1x4xf32>
    %14 = vector.shape_cast %11 : vector<1x4xf32> to vector<1x1x4xf32>
    tpu.vector_store %arg3[%c0_9, %c0_10, %c0_11], %14 {strides = array<i32>} : memref<1x1x4xf32, #tpu.memory_space<vmem>>, vector<1x1x4xf32>,
    return
  }
  func.func @transform_0(%arg0: i32) -> (i32, i32, i32, i32) {
    %c0_i32 = arith.constant 0 : i32
    %c0_i32_0 = arith.constant 0 : i32
    %c0_i32_1 = arith.constant 0 : i32
    %c0_i32_2 = arith.constant 0 : i32
    return %arg0, %c0_i32, %c0_i32_0, %c0_i32_1 : i32, i32, i32, i32
  }
  func.func @transform_1(%arg0: i32) -> (i32, i32, i32) {
    %c0_i32 = arith.constant 0 : i32
    %c0_i32_0 = arith.constant 0 : i32
    %c0_i32_1 = arith.constant 0 : i32
    return %arg0, %c0_i32, %c0_i32_0 : i32, i32, i32
  }
  func.func @transform_2(%arg0: i32) -> (i32, i32, i32) {
    %c0_i32 = arith.constant 0 : i32
    %c0_i32_0 = arith.constant 0 : i32
    %c0_i32_1 = arith.constant 0 : i32
    return %arg0, %c0_i32, %c0_i32_0 : i32, i32, i32
  }
}

</mosaic_0001>

<llo_original>
// kernel: tpu_custom_call.1
$region0: #{tpu_custom_call.1}
  #allocation0 [shape = 'u32[]', space=smem, size = 0x4, offset = 0x4, fixed_abs, tag = 'smem constant byte address 0x4 - core index']
  #allocation1 [shape = 'u32[72,128]{1,0:T(1,128)}', space=vmem, size = 0x9000, scoped, tag = 'internal scratch']
  %s0 = inlined_call_operand.vmem [shape: f32[2,18,18,4], index: 0, kind: input, shape index: {}]
  %s1 = inlined_call_operand.hbm [shape: f32[2,1,4], index: 1, kind: output, shape index: {0}]
  %s2 = inlined_call_operand.hbm [shape: f32[2,1,4], index: 2, kind: output, shape index: {1}]
  %3 = xla_tuple %s1, %s2
  %s4 = sld [smem:[#allocation0]]
  $region45: #{tpu_custom_call.1} parent=0
    _
  %s6 = ssub.s32 1, %s4
  %s7 = scalar_select 0, %s6, %s4
  $region1: #{tpu_custom_call.1} parent=0
    #allocation2 [shape = 'u8[1024]{0}', space=vmem, size = 0x400, scoped, tag = 'output window, operand 0']
    #allocation3 [shape = 's32[2]{0}', space=sflag, size = 0x8, scoped, tag = 'scoped memory for tpu_custom_call.1']
    #allocation4 [shape = 'u8[1024]{0}', space=vmem, size = 0x400, scoped, tag = 'output window, operand 1']
    #allocation5 [shape = 's32[2]{0}', space=sflag, size = 0x8, scoped, tag = 'scoped memory for tpu_custom_call.1']
    %8 = vsyncpa [#allocation3], 0
    %s9 = scalar_lea.sflag [#allocation3], 1
    %10 = vsyncpa %s9, 0
    %11 = vsyncpa [#allocation5], 0
    %s12 = scalar_lea.sflag [#allocation5], 1
    %13 = vsyncpa %s12, 0
    loop: start=0, step=1, limit=4
    $region2: #{tpu_custom_call.1} parent=1 // loop_pre_header
      _
    $region3: #{tpu_custom_call.1} parent=1 // loop_header
      %s15 = sphi 0, %s19
      %p16 = scmp.ge.s32.totalorder %s15, 4
      %s25 = sphi 0, %s27
      %s28 = sphi 0, %s25
      %s29 = sphi 0, %s28
      %s45 = sphi 0, %s29
      %s51 = sphi 0, %s53
      %s54 = sphi 0, %s51
      %s55 = sphi 0, %s54
      %s71 = sphi 0, %s55
      %s77 = sphi 0, %s79
      %s80 = sphi 0, %s77
      %s81 = sphi 0, %s80
      %s97 = sphi 0, %s81
    $region4: #{tpu_custom_call.1} parent=1 // loop_header_branch
      %18 = sbr.rel (%p16) target = $region8
    $region5: #{tpu_custom_call.1} parent=1 // loop_body
      %s20 = ssub.s32 %s15, 1
      %s21 = ssub.s32 %s15, 2
      %s22 = sadd.s32 %s15, 1
      %s23 = ssub.s32 %s15, %s22
      %p24 = scmp.eq.s32.totalorder %s23, 0
      %s26 = sadd.s32 %s25, 1
      %s27 = scalar_select %p24, %s25, %s26
      %p30 = pneg %p24
      %p31 = scmp.eq.s32.totalorder %s15, 1
      %p32 = por %p30, %p31
      %p33 = scmp.ne.s32.totalorder %s25, %s28
      %p34 = scmp.eq.s32.totalorder %s15, 0
      %p35 = por %p33, %p34
      %p36 = scmp.ne.s32.totalorder %s25, %s28
      %p37 = scmp.eq.s32.totalorder %s20, 1
      %p38 = por %p36, %p37
      %p39 = scmp.ne.s32.totalorder %s28, %s29
      %p40 = scmp.eq.s32.totalorder %s20, 0
      %p41 = por %p39, %p40
      %p42 = scmp.ne.s32.totalorder %s28, %s29
      %p43 = scmp.eq.s32.totalorder %s21, 1
      %p44 = por %p42, %p43
      %p46 = scmp.ne.s32.totalorder %s29, %s45
      %p47 = scmp.eq.s32.totalorder %s21, 0
      %p48 = por %p46, %p47
      %s49 = ssub.s32 %s15, %s22
      %p50 = scmp.eq.s32.totalorder %s49, 0
      %s52 = sadd.s32 %s51, 1
      %s53 = scalar_select %p50, %s51, %s52
      %p56 = pneg %p50
      %p57 = scmp.eq.s32.totalorder %s15, 1
      %p58 = por %p56, %p57
      %p59 = scmp.ne.s32.totalorder %s51, %s54
      %p60 = scmp.eq.s32.totalorder %s15, 0
      %p61 = por %p59, %p60
      %p62 = scmp.ne.s32.totalorder %s51, %s54
      %p63 = scmp.eq.s32.totalorder %s20, 1
      %p64 = por %p62, %p63
      %p65 = scmp.ne.s32.totalorder %s54, %s55
      %p66 = scmp.eq.s32.totalorder %s20, 0
      %p67 = por %p65, %p66
      %p68 = scmp.ne.s32.totalorder %s54, %s55
      %p69 = scmp.eq.s32.totalorder %s21, 1
      %p70 = por %p68, %p69
      %p72 = scmp.ne.s32.totalorder %s55, %s71
      %p73 = scmp.eq.s32.totalorder %s21, 0
      %p74 = por %p72, %p73
      %s75 = ssub.s32 %s15, %s22
      %p76 = scmp.eq.s32.totalorder %s75, 0
      %s78 = sadd.s32 %s77, 1
      %s79 = scalar_select %p76, %s77, %s78
      %p82 = pneg %p76
      %p83 = scmp.eq.s32.totalorder %s15, 1
      %p84 = por %p82, %p83
      %p85 = scmp.ne.s32.totalorder %s77, %s80
      %p86 = scmp.eq.s32.totalorder %s15, 0
      %p87 = por %p85, %p86
      %p88 = scmp.ne.s32.totalorder %s77, %s80
      %p89 = scmp.eq.s32.totalorder %s20, 1
      %p90 = por %p88, %p89
      %p91 = scmp.ne.s32.totalorder %s80, %s81
      %p92 = scmp.eq.s32.totalorder %s20, 0
      %p93 = por %p91, %p92
      %p94 = scmp.ne.s32.totalorder %s80, %s81
      %p95 = scmp.eq.s32.totalorder %s21, 1
      %p96 = por %p94, %p95
      %p98 = scmp.ne.s32.totalorder %s81, %s97
      %p99 = scmp.eq.s32.totalorder %s21, 0
      %p100 = por %p98, %p99
      %p101 = scmp.le.s32.totalorder 1, %s15
      %p102 = scmp.lt.s32.totalorder %s15, 3
      %p103 = pnand %p101, %p102
      %p104 = pneg %p103
      // Predicated region
      $region9: #{tpu_custom_call.1} parent=5 // pred_check
        _
      $region10: #{tpu_custom_call.1} parent=5 // pred_check_branch
        %106 = sbr.rel (%p103) target = $region12
      $region11: #{tpu_custom_call.1} parent=5 // pred_region
        %s107 = ssub.s32 %s15, 1
      $region12: #{tpu_custom_call.1} parent=5 // pred_fallthru
        _
      %p108 = scmp.lt.s32.totalorder %s15, 2
      // Predicated region
      $region13: #{tpu_custom_call.1} parent=5 // pred_check
        %p109 = pneg %p108
      $region14: #{tpu_custom_call.1} parent=5 // pred_check_branch
        %111 = sbr.rel (%p109) target = $region16
      $region15: #{tpu_custom_call.1} parent=5 // pred_region
        // Predicated region
        $region17: #{tpu_custom_call.1} parent=15 // pred_check
          %p112 = pneg %p35
        $region18: #{tpu_custom_call.1} parent=15 // pred_check_branch
          %114 = sbr.rel (%p112) target = $region20
        $region19: #{tpu_custom_call.1} parent=15 // pred_region
          %p115 = scmp.lt.s32.totalorder %s15, 1
          %s116 = scalar_select %p115, %s15, 1
          %s117 = smul.addr %s116, 54
          %s118 = smul.addr %s117, 8
          %s119 = scalar_lea.vmem %s0, %s118
        $region20: #{tpu_custom_call.1} parent=15 // pred_fallthru
          _
      $region16: #{tpu_custom_call.1} parent=5 // pred_fallthru
        _
      %p120 = scmp.le.s32.totalorder 1, %s15
      %p121 = scmp.lt.s32.totalorder %s15, 3
      %p122 = pnand %p120, %p121
      %p123 = pneg %p122
      // Predicated region
      $region21: #{tpu_custom_call.1} parent=5 // pred_check
        _
      $region22: #{tpu_custom_call.1} parent=5 // pred_check_branch
        %125 = sbr.rel (%p122) target = $region24
      $region23: #{tpu_custom_call.1} parent=5 // pred_region
        %s126 = ssub.s32 %s15, 1
        %p127 = scmp.lt.s32.totalorder %s20, 1
        %s128 = scalar_select %p127, %s20, 1
        %s129 = smul.addr %s128, 54
        %s130 = smul.addr %s129, 8
        %s131 = scalar_lea.vmem %s0, %s130
        %p132 = pneg %p41
        %p133 = pneg %p38
        %p134 = pneg %p67
        %p135 = pneg %p64
        %s136 = sand.u32 %s54, 1
        %s137 = scalar_lea.sflag [#allocation3], %s136
        %s138 = sand.u32 %s54, 1
        %s139 = scalar_lea.vmem [#allocation2], %s138
        %p140 = pneg %p93
        %p141 = pneg %p90
        %s142 = sand.u32 %s80, 1
        %s143 = scalar_lea.sflag [#allocation5], %s142
        %s144 = sand.u32 %s80, 1
        %s145 = scalar_lea.vmem [#allocation4], %s144
        %p146 = scmp.lt.s32.totalorder %s20, 1
        %s147 = scalar_select %p146, %s20, 1
        %s148 = smul.addr %s147, 54
        %s149 = smul.addr %s148, 8
        %s150 = scalar_lea.vmem %s0, %s149
        %v151 = vld [vmem:[%s150] sm:$0xff]
        %v152 = vld [vmem:[%s150 + $0x8] sm:$0xff]
        %v153 = vld [vmem:[%s150 + $0x10] sm:$0x3]
        %v154 = vld [vmem:[%s150 + $0x18] sm:$0xff]
        %v155 = vld [vmem:[%s150 + $0x20] sm:$0xff]
        %v156 = vld [vmem:[%s150 + $0x28] sm:$0x3]
        %v157 = vld [vmem:[%s150 + $0x30] sm:$0xff]
        %v158 = vld [vmem:[%s150 + $0x38] sm:$0xff]
        %v159 = vld [vmem:[%s150 + $0x40] sm:$0x3]
        %v160 = vld [vmem:[%s150 + $0x48] sm:$0xff]
        %v161 = vld [vmem:[%s150 + $0x50] sm:$0xff]
        %v162 = vld [vmem:[%s150 + $0x58] sm:$0x3]
        %v163 = vld [vmem:[%s150 + $0x60] sm:$0xff]
        %v164 = vld [vmem:[%s150 + $0x68] sm:$0xff]
        %v165 = vld [vmem:[%s150 + $0x70] sm:$0x3]
        %v166 = vld [vmem:[%s150 + $0x78] sm:$0xff]
        %v167 = vld [vmem:[%s150 + $0x80] sm:$0xff]
        %v168 = vld [vmem:[%s150 + $0x88] sm:$0x3]
        %v169 = vld [vmem:[%s150 + $0x90] sm:$0xff]
        %v170 = vld [vmem:[%s150 + $0x98] sm:$0xff]
        %v171 = vld [vmem:[%s150 + $0xa0] sm:$0x3]
        %v172 = vld [vmem:[%s150 + $0xa8] sm:$0xff]
        %v173 = vld [vmem:[%s150 + $0xb0] sm:$0xff]
        %v174 = vld [vmem:[%s150 + $0xb8] sm:$0x3]
        %v175 = vld [vmem:[%s150 + $0xc0] sm:$0xff]
        %v176 = vld [vmem:[%s150 + $0xc8] sm:$0xff]
        %v177 = vld [vmem:[%s150 + $0xd0] sm:$0x3]
        %v178 = vld [vmem:[%s150 + $0xd8] sm:$0xff]
        %v179 = vld [vmem:[%s150 + $0xe0] sm:$0xff]
        %v180 = vld [vmem:[%s150 + $0xe8] sm:$0x3]
        %v181 = vld [vmem:[%s150 + $0xf0] sm:$0xff]
        %v182 = vld [vmem:[%s150 + $0xf8] sm:$0xff]
        %v183 = vld [vmem:[%s150 + $0x100] sm:$0x3]
        %v184 = vld [vmem:[%s150 + $0x108] sm:$0xff]
        %v185 = vld [vmem:[%s150 + $0x110] sm:$0xff]
        %v186 = vld [vmem:[%s150 + $0x118] sm:$0x3]
        %v187 = vld [vmem:[%s150 + $0x120] sm:$0xff]
        %v188 = vld [vmem:[%s150 + $0x128] sm:$0xff]
        %v189 = vld [vmem:[%s150 + $0x130] sm:$0x3]
        %v190 = vld [vmem:[%s150 + $0x138] sm:$0xff]
        %v191 = vld [vmem:[%s150 + $0x140] sm:$0xff]
        %v192 = vld [vmem:[%s150 + $0x148] sm:$0x3]
        %v193 = vld [vmem:[%s150 + $0x150] sm:$0xff]
        %v194 = vld [vmem:[%s150 + $0x158] sm:$0xff]
        %v195 = vld [vmem:[%s150 + $0x160] sm:$0x3]
        %v196 = vld [vmem:[%s150 + $0x168] sm:$0xff]
        %v197 = vld [vmem:[%s150 + $0x170] sm:$0xff]
        %v198 = vld [vmem:[%s150 + $0x178] sm:$0x3]
        %v199 = vld [vmem:[%s150 + $0x180] sm:$0xff]
        %v200 = vld [vmem:[%s150 + $0x188] sm:$0xff]
        %v201 = vld [vmem:[%s150 + $0x190] sm:$0x3]
        %v202 = vld [vmem:[%s150 + $0x198] sm:$0xff]
        %v203 = vld [vmem:[%s150 + $0x1a0] sm:$0xff]
        %v204 = vld [vmem:[%s150 + $0x1a8] sm:$0x3]
        %v205 = vmul.f32 %v151, %v151
        %v206 = vmul.f32 %v152, %v152
        %v207 = vmul.f32 %v153, %v153
        %v208 = vmul.f32 %v154, %v154
        %v209 = vmul.f32 %v155, %v155
        %v210 = vmul.f32 %v156, %v156
        %v211 = vmul.f32 %v157, %v157
        %v212 = vmul.f32 %v158, %v158
        %v213 = vmul.f32 %v159, %v159
        %v214 = vmul.f32 %v160, %v160
        %v215 = vmul.f32 %v161, %v161
        %v216 = vmul.f32 %v162, %v162
        %v217 = vmul.f32 %v163, %v163
        %v218 = vmul.f32 %v164, %v164
        %v219 = vmul.f32 %v165, %v165
        %v220 = vmul.f32 %v166, %v166
        %v221 = vmul.f32 %v167, %v167
        %v222 = vmul.f32 %v168, %v168
        %v223 = vmul.f32 %v169, %v169
        %v224 = vmul.f32 %v170, %v170
        %v225 = vmul.f32 %v171, %v171
        %v226 = vmul.f32 %v172, %v172
        %v227 = vmul.f32 %v173, %v173
        %v228 = vmul.f32 %v174, %v174
        %v229 = vmul.f32 %v175, %v175
        %v230 = vmul.f32 %v176, %v176
        %v231 = vmul.f32 %v177, %v177
        %v232 = vmul.f32 %v178, %v178
        %v233 = vmul.f32 %v179, %v179
        %v234 = vmul.f32 %v180, %v180
        %v235 = vmul.f32 %v181, %v181
        %v236 = vmul.f32 %v182, %v182
        %v237 = vmul.f32 %v183, %v183
        %v238 = vmul.f32 %v184, %v184
        %v239 = vmul.f32 %v185, %v185
        %v240 = vmul.f32 %v186, %v186
        %v241 = vmul.f32 %v187, %v187
        %v242 = vmul.f32 %v188, %v188
        %v243 = vmul.f32 %v189, %v189
        %v244 = vmul.f32 %v190, %v190
        %v245 = vmul.f32 %v191, %v191
        %v246 = vmul.f32 %v192, %v192
        %v247 = vmul.f32 %v193, %v193
        %v248 = vmul.f32 %v194, %v194
        %v249 = vmul.f32 %v195, %v195
        %v250 = vmul.f32 %v196, %v196
        %v251 = vmul.f32 %v197, %v197
        %v252 = vmul.f32 %v198, %v198
        %v253 = vmul.f32 %v199, %v199
        %v254 = vmul.f32 %v200, %v200
        %v255 = vmul.f32 %v201, %v201
        %v256 = vmul.f32 %v202, %v202
        %v257 = vmul.f32 %v203, %v203
        %v258 = vmul.f32 %v204, %v204
        %vm259 = vcmask 31744
        %v260 = vsel %vm259, %v151, 0.0
        %v261 = vsel %vm259, %v154, 0.0
        %v262 = vadd.f32 %v260, %v261
        %v263 = vsel %vm259, %v157, 0.0
        %v264 = vadd.f32 %v262, %v263
        %v265 = vsel %vm259, %v160, 0.0
        %v266 = vadd.f32 %v264, %v265
        %v267 = vsel %vm259, %v163, 0.0
        %v268 = vadd.f32 %v266, %v267
        %v269 = vsel %vm259, %v166, 0.0
        %v270 = vadd.f32 %v268, %v269
        %v271 = vsel %vm259, %v169, 0.0
        %v272 = vadd.f32 %v270, %v271
        %v273 = vsel %vm259, %v172, 0.0
        %v274 = vadd.f32 %v272, %v273
        %v275 = vsel %vm259, %v175, 0.0
        %v276 = vadd.f32 %v274, %v275
        %v277 = vsel %vm259, %v178, 0.0
        %v278 = vadd.f32 %v276, %v277
        %v279 = vsel %vm259, %v181, 0.0
        %v280 = vadd.f32 %v278, %v279
        %v281 = vsel %vm259, %v184, 0.0
        %v282 = vadd.f32 %v280, %v281
        %v283 = vsel %vm259, %v187, 0.0
        %v284 = vadd.f32 %v282, %v283
        %v285 = vsel %vm259, %v190, 0.0
        %v286 = vadd.f32 %v284, %v285
        %v287 = vsel %vm259, %v193, 0.0
        %v288 = vadd.f32 %v286, %v287
        %v289 = vsel %vm259, %v196, 0.0
        %v290 = vadd.f32 %v288, %v289
        %v291 = vsel %vm259, %v199, 0.0
        %v292 = vadd.f32 %v290, %v291
        %v293 = vsel %vm259, %v202, 0.0
        %v294 = vadd.f32 %v292, %v293
        %v295 = vsel %vm259, %v152, 0.0
        %v296 = vsel %vm259, %v155, 0.0
        %v297 = vadd.f32 %v295, %v296
        %v298 = vsel %vm259, %v158, 0.0
        %v299 = vadd.f32 %v297, %v298
        %v300 = vsel %vm259, %v161, 0.0
        %v301 = vadd.f32 %v299, %v300
        %v302 = vsel %vm259, %v164, 0.0
        %v303 = vadd.f32 %v301, %v302
        %v304 = vsel %vm259, %v167, 0.0
        %v305 = vadd.f32 %v303, %v304
        %v306 = vsel %vm259, %v170, 0.0
        %v307 = vadd.f32 %v305, %v306
        %v308 = vsel %vm259, %v173, 0.0
        %v309 = vadd.f32 %v307, %v308
        %v310 = vsel %vm259, %v176, 0.0
        %v311 = vadd.f32 %v309, %v310
        %v312 = vsel %vm259, %v179, 0.0
        %v313 = vadd.f32 %v311, %v312
        %v314 = vsel %vm259, %v182, 0.0
        %v315 = vadd.f32 %v313, %v314
        %v316 = vsel %vm259, %v185, 0.0
        %v317 = vadd.f32 %v315, %v316
        %v318 = vsel %vm259, %v188, 0.0
        %v319 = vadd.f32 %v317, %v318
        %v320 = vsel %vm259, %v191, 0.0
        %v321 = vadd.f32 %v319, %v320
        %v322 = vsel %vm259, %v194, 0.0
        %v323 = vadd.f32 %v321, %v322
        %v324 = vsel %vm259, %v197, 0.0
        %v325 = vadd.f32 %v323, %v324
        %v326 = vsel %vm259, %v200, 0.0
        %v327 = vadd.f32 %v325, %v326
        %v328 = vsel %vm259, %v203, 0.0
        %v329 = vadd.f32 %v327, %v328
        %vm330 = vcmask 25600
        %v331 = vsel %vm330, %v153, 0.0
        %v332 = vsel %vm330, %v156, 0.0
        %v333 = vadd.f32 %v331, %v332
        %v334 = vsel %vm330, %v159, 0.0
        %v335 = vadd.f32 %v333, %v334
        %v336 = vsel %vm330, %v162, 0.0
        %v337 = vadd.f32 %v335, %v336
        %v338 = vsel %vm330, %v165, 0.0
        %v339 = vadd.f32 %v337, %v338
        %v340 = vsel %vm330, %v168, 0.0
        %v341 = vadd.f32 %v339, %v340
        %v342 = vsel %vm330, %v171, 0.0
        %v343 = vadd.f32 %v341, %v342
        %v344 = vsel %vm330, %v174, 0.0
        %v345 = vadd.f32 %v343, %v344
        %v346 = vsel %vm330, %v177, 0.0
        %v347 = vadd.f32 %v345, %v346
        %v348 = vsel %vm330, %v180, 0.0
        %v349 = vadd.f32 %v347, %v348
        %v350 = vsel %vm330, %v183, 0.0
        %v351 = vadd.f32 %v349, %v350
        %v352 = vsel %vm330, %v186, 0.0
        %v353 = vadd.f32 %v351, %v352
        %v354 = vsel %vm330, %v189, 0.0
        %v355 = vadd.f32 %v353, %v354
        %v356 = vsel %vm330, %v192, 0.0
        %v357 = vadd.f32 %v355, %v356
        %v358 = vsel %vm330, %v195, 0.0
        %v359 = vadd.f32 %v357, %v358
        %v360 = vsel %vm330, %v198, 0.0
        %v361 = vadd.f32 %v359, %v360
        %v362 = vsel %vm330, %v201, 0.0
        %v363 = vadd.f32 %v361, %v362
        %v364 = vsel %vm330, %v204, 0.0
        %v365 = vadd.f32 %v363, %v364
        %v366 = vsel %vm259, %v205, 0.0
        %v367 = vsel %vm259, %v208, 0.0
        %v368 = vadd.f32 %v366, %v367
        %v369 = vsel %vm259, %v211, 0.0
        %v370 = vadd.f32 %v368, %v369
        %v371 = vsel %vm259, %v214, 0.0
        %v372 = vadd.f32 %v370, %v371
        %v373 = vsel %vm259, %v217, 0.0
        %v374 = vadd.f32 %v372, %v373
        %v375 = vsel %vm259, %v220, 0.0
        %v376 = vadd.f32 %v374, %v375
        %v377 = vsel %vm259, %v223, 0.0
        %v378 = vadd.f32 %v376, %v377
        %v379 = vsel %vm259, %v226, 0.0
        %v380 = vadd.f32 %v378, %v379
        %v381 = vsel %vm259, %v229, 0.0
        %v382 = vadd.f32 %v380, %v381
        %v383 = vsel %vm259, %v232, 0.0
        %v384 = vadd.f32 %v382, %v383
        %v385 = vsel %vm259, %v235, 0.0
        %v386 = vadd.f32 %v384, %v385
        %v387 = vsel %vm259, %v238, 0.0
        %v388 = vadd.f32 %v386, %v387
        %v389 = vsel %vm259, %v241, 0.0
        %v390 = vadd.f32 %v388, %v389
        %v391 = vsel %vm259, %v244, 0.0
        %v392 = vadd.f32 %v390, %v391
        %v393 = vsel %vm259, %v247, 0.0
        %v394 = vadd.f32 %v392, %v393
        %v395 = vsel %vm259, %v250, 0.0
        %v396 = vadd.f32 %v394, %v395
        %v397 = vsel %vm259, %v253, 0.0
        %v398 = vadd.f32 %v396, %v397
        %v399 = vsel %vm259, %v256, 0.0
        %v400 = vadd.f32 %v398, %v399
        %v401 = vsel %vm259, %v206, 0.0
        %v402 = vsel %vm259, %v209, 0.0
        %v403 = vadd.f32 %v401, %v402
        %v404 = vsel %vm259, %v212, 0.0
        %v405 = vadd.f32 %v403, %v404
        %v406 = vsel %vm259, %v215, 0.0
        %v407 = vadd.f32 %v405, %v406
        %v408 = vsel %vm259, %v218, 0.0
        %v409 = vadd.f32 %v407, %v408
        %v410 = vsel %vm259, %v221, 0.0
        %v411 = vadd.f32 %v409, %v410
        %v412 = vsel %vm259, %v224, 0.0
        %v413 = vadd.f32 %v411, %v412
        %v414 = vsel %vm259, %v227, 0.0
        %v415 = vadd.f32 %v413, %v414
        %v416 = vsel %vm259, %v230, 0.0
        %v417 = vadd.f32 %v415, %v416
        %v418 = vsel %vm259, %v233, 0.0
        %v419 = vadd.f32 %v417, %v418
        %v420 = vsel %vm259, %v236, 0.0
        %v421 = vadd.f32 %v419, %v420
        %v422 = vsel %vm259, %v239, 0.0
        %v423 = vadd.f32 %v421, %v422
        %v424 = vsel %vm259, %v242, 0.0
        %v425 = vadd.f32 %v423, %v424
        %v426 = vsel %vm259, %v245, 0.0
        %v427 = vadd.f32 %v425, %v426
        %v428 = vsel %vm259, %v248, 0.0
        %v429 = vadd.f32 %v427, %v428
        %v430 = vsel %vm259, %v251, 0.0
        %v431 = vadd.f32 %v429, %v430
        %v432 = vsel %vm259, %v254, 0.0
        %v433 = vadd.f32 %v431, %v432
        %v434 = vsel %vm259, %v257, 0.0
        %v435 = vadd.f32 %v433, %v434
        %v436 = vsel %vm330, %v207, 0.0
        %v437 = vsel %vm330, %v210, 0.0
        %v438 = vadd.f32 %v436, %v437
        %v439 = vsel %vm330, %v213, 0.0
        %v440 = vadd.f32 %v438, %v439
        %v441 = vsel %vm330, %v216, 0.0
        %v442 = vadd.f32 %v440, %v441
        %v443 = vsel %vm330, %v219, 0.0
        %v444 = vadd.f32 %v442, %v443
        %v445 = vsel %vm330, %v222, 0.0
        %v446 = vadd.f32 %v444, %v445
        %v447 = vsel %vm330, %v225, 0.0
        %v448 = vadd.f32 %v446, %v447
        %v449 = vsel %vm330, %v228, 0.0
        %v450 = vadd.f32 %v448, %v449
        %v451 = vsel %vm330, %v231, 0.0
        %v452 = vadd.f32 %v450, %v451
        %v453 = vsel %vm330, %v234, 0.0
        %v454 = vadd.f32 %v452, %v453
        %v455 = vsel %vm330, %v237, 0.0
        %v456 = vadd.f32 %v454, %v455
        %v457 = vsel %vm330, %v240, 0.0
        %v458 = vadd.f32 %v456, %v457
        %v459 = vsel %vm330, %v243, 0.0
        %v460 = vadd.f32 %v458, %v459
        %v461 = vsel %vm330, %v246, 0.0
        %v462 = vadd.f32 %v460, %v461
        %v463 = vsel %vm330, %v249, 0.0
        %v464 = vadd.f32 %v462, %v463
        %v465 = vsel %vm330, %v252, 0.0
        %v466 = vadd.f32 %v464, %v465
        %v467 = vsel %vm330, %v255, 0.0
        %v468 = vadd.f32 %v466, %v467
        %v469 = vsel %vm330, %v258, 0.0
        %v470 = vadd.f32 %v468, %v469
        %v471 = vsel %vm259, %v294, 0.0
        %v472 = vsel %vm259, %v329, 0.0
        %v473 = vadd.f32 %v471, %v472
        %v474 = vsel %vm330, %v365, 0.0
        %v475 = vadd.f32 %v473, %v474
        %v476 = vrot.slane %v475, 4
        %v477 = vadd.f32 %v475, %v476
        %v478 = vrot.slane %v477, 2
        %v479 = vadd.f32 %v477, %v478
        %v480 = vrot.slane %v479, 1
        %v481 = vadd.f32 %v479, %v480
        %vm482 = vcmask 24576
        %483 = vst.msk [vmem:[%s139] sm:$0x1] %vm482, %v481
        %v484 = vsel %vm259, %v400, 0.0
        %v485 = vsel %vm259, %v435, 0.0
        %v486 = vadd.f32 %v484, %v485
        %v487 = vsel %vm330, %v470, 0.0
        %v488 = vadd.f32 %v486, %v487
        %v489 = vrot.slane %v488, 4
        %v490 = vadd.f32 %v488, %v489
        %v491 = vrot.slane %v490, 2
        %v492 = vadd.f32 %v490, %v491
        %v493 = vrot.slane %v492, 1
        %v494 = vadd.f32 %v492, %v493
        %495 = vst.msk [vmem:[%s145] sm:$0x1] %vm482, %v494
        %s496 = sand.u32 %s54, 1
        %s497 = scalar_lea.sflag [#allocation3], %s496
        %s498 = sand.u32 %s54, 1
        %s499 = scalar_lea.vmem [#allocation2], %s498
        %s500 = sand.u32 %s80, 1
        %s501 = scalar_lea.sflag [#allocation5], %s500
        %s502 = sand.u32 %s80, 1
        %s503 = scalar_lea.vmem [#allocation4], %s502
        // Predicated region
        $region25: #{tpu_custom_call.1} parent=23 // pred_check
          %p504 = pneg %p64
        $region26: #{tpu_custom_call.1} parent=23 // pred_check_branch
          %506 = sbr.rel (%p504) target = $region28
        $region27: #{tpu_custom_call.1} parent=23 // pred_region
          %508 = vsyncadd %s497, 0
          %s509 = scalar_lea.hbm %s1, %s20
          %s511 = sshll.u32 %s499, 4
          %s512 = int_to_ptr.vmem [resolvable:$true] %s511
          %s513 = sshll.u32 %s509, 4
          %s514 = int_to_ptr.hbm [resolvable:$true] %s513
          %516 = dma.vmem_to_hbm [thread:$0]  %s512, 16, %s514, %s497
        $region28: #{tpu_custom_call.1} parent=23 // pred_fallthru
          _
        // Predicated region
        $region29: #{tpu_custom_call.1} parent=23 // pred_check
          %p517 = pneg %p90
        $region30: #{tpu_custom_call.1} parent=23 // pred_check_branch
          %519 = sbr.rel (%p517) target = $region32
        $region31: #{tpu_custom_call.1} parent=23 // pred_region
          %521 = vsyncadd %s501, 0
          %s522 = scalar_lea.hbm %s2, %s20
          %s524 = sshll.u32 %s503, 4
          %s525 = int_to_ptr.vmem [resolvable:$true] %s524
          %s526 = sshll.u32 %s522, 4
          %s527 = int_to_ptr.hbm [resolvable:$true] %s526
          %529 = dma.vmem_to_hbm [thread:$0]  %s525, 16, %s527, %s501
        $region32: #{tpu_custom_call.1} parent=23 // pred_fallthru
          _
      $region24: #{tpu_custom_call.1} parent=5 // pred_fallthru
        _
      %p530 = scmp.le.s32.totalorder 2, %s15
      // Predicated region
      $region33: #{tpu_custom_call.1} parent=5 // pred_check
        %p531 = pneg %p530
      $region34: #{tpu_custom_call.1} parent=5 // pred_check_branch
        %533 = sbr.rel (%p531) target = $region36
      $region35: #{tpu_custom_call.1} parent=5 // pred_region
        %s534 = ssub.s32 %s15, 2
        // Predicated region
        $region37: #{tpu_custom_call.1} parent=35 // pred_check
          %p535 = pneg %p70
        $region38: #{tpu_custom_call.1} parent=35 // pred_check_branch
          %537 = sbr.rel (%p535) target = $region40
        $region39: #{tpu_custom_call.1} parent=35 // pred_region
          %s538 = sand.u32 %s55, 1
          %s539 = scalar_lea.sflag [#allocation3], %s538
          %s540 = sand.u32 %s55, 1
          %s541 = scalar_lea.vmem [#allocation2], %s540
          %543 = dma.done %s539, 16
        $region40: #{tpu_custom_call.1} parent=35 // pred_fallthru
          _
        // Predicated region
        $region41: #{tpu_custom_call.1} parent=35 // pred_check
          %p544 = pneg %p96
        $region42: #{tpu_custom_call.1} parent=35 // pred_check_branch
          %546 = sbr.rel (%p544) target = $region44
        $region43: #{tpu_custom_call.1} parent=35 // pred_region
          %s547 = sand.u32 %s81, 1
          %s548 = scalar_lea.sflag [#allocation5], %s547
          %s549 = sand.u32 %s81, 1
          %s550 = scalar_lea.vmem [#allocation4], %s549
          %552 = dma.done %s548, 16
        $region44: #{tpu_custom_call.1} parent=35 // pred_fallthru
          _
      $region36: #{tpu_custom_call.1} parent=5 // pred_fallthru
        _
    $region6: #{tpu_custom_call.1} parent=1 // loop_footer
      %s19 = sadd.s32 1, %s15
    $region7: #{tpu_custom_call.1} parent=1 // loop_footer_branch
      %14 = sbr.rel target = $region3
    $region8: #{tpu_custom_call.1} parent=1 // loop_exit
      _
    %553 = vsyncpa [#allocation3], 1
    %s554 = scalar_lea.sflag [#allocation3], 1
    %555 = vsyncpa %s554, 1
    %556 = vsyncpa [#allocation5], 1
    %s557 = scalar_lea.sflag [#allocation5], 1
    %558 = vsyncpa %s557, 1

</llo_original>
